<compile_context>
chip_gen: v7x
topology: tpu7x:2x2x1
jax: 0.10.0
libtpu: 0.0.40
codegen_flags: <defaults>
</compile_context>

<pallas_src>
import jax
import jax.numpy as jnp
from jax.experimental import pallas as pl
from jax.experimental.pallas import tpu as pltpu


# ----------------------------- fused Pallas kernel -------------------------- #

def _make_decoder_kernel(n_layers, B, H, E, V):
    """Fused decoder-step kernel; one grid step per LSTM layer."""
    assert E == H, "fused kernel path requires emb_dim == hid_dim"
    # TODO(synk): support E != H by padding the layer-0 weight rows / x scratch.

    def kernel(tok_ref,        # SMEM  [B] int32            (scalar prefetch)
               emb_ref,        # VMEM  [V, E]               (constant block, loaded once)
               h_in_ref,       # VMEM  [1, B, H]            (layer l slice, streamed)
               c_in_ref,       # VMEM  [1, B, H]
               w_ref,          # VMEM  [1, E+H, 4H]         (layer l fused weights, i|f|o|g cols)
               b_ref,          # VMEM  [1, 1, 4H]
               wout_ref,       # VMEM  [H, V]
               bout_ref,       # VMEM  [1, V]
               pred_ref,       # VMEM  [B, V]   out (written on last layer only)
               h_out_ref,      # VMEM  [1, B, H] out
               c_out_ref,      # VMEM  [1, B, H] out
               x_ref):         # VMEM scratch [B, H] -- activation carried across layers
        layer = pl.program_id(0)

        # ---- Embedding gather on the first grid step only --------------------
        @pl.when(layer == 0)
        def _():
            # Table is VMEM-resident; B dynamic-row reads, no per-row DMA latency.
            for b in range(B):
                x_ref[pl.ds(b, 1), :] = emb_ref[pl.ds(tok_ref[b], 1), :]
            # self.dropout(embedded) is identity in eval mode.

        # ---- One LSTM layer ---------------------------------------------------
        h_prev = h_in_ref[0]                         # [B, H]
        c_prev = c_in_ref[0]                         # [B, H]
        x = x_ref[...]                               # [B, H]

        # K = E+H = 256: one full-depth MXU push on v6e/v7x.
        # (v5e note: its MXU is 128-deep, so x@W_ih + h@W_hh without the concat
        #  avoids the [B, E+H] temp there.)
        xh = jnp.concatenate([x, h_prev], axis=1)    # [B, E+H]
        gates = (jnp.dot(xh, w_ref[0], preferred_element_type=jnp.float32)
                 + b_ref[0])                         # [B, 4H], columns = i|f|o|g

        # Gate columns pre-permuted to (i, f, o, g): sigmoid on [B,3H], tanh on [B,H].
        sig = jax.nn.sigmoid(gates[:, 0:3 * H])
        g_g = jnp.tanh(gates[:, 3 * H:4 * H])
        i_g = sig[:, 0 * H:1 * H]
        f_g = sig[:, 1 * H:2 * H]
        o_g = sig[:, 2 * H:3 * H]

        c_new = f_g * c_prev + i_g * g_g
        h_new = o_g * jnp.tanh(c_new)

        h_out_ref[0] = h_new
        c_out_ref[0] = c_new
        x_ref[...] = h_new                           # inter-layer dropout: identity (eval)

        # ---- fc_out on the last layer's grid step -----------------------------
        @pl.when(layer == n_layers - 1)
        def _():
            pred_ref[...] = (jnp.dot(h_new, wout_ref[...],
                                     preferred_element_type=jnp.float32)
                             + bout_ref[...])

    return kernel


# ----------------------------- Decoder forward ------------------------------ #

def decoder_forward(kparams, token_ids, hidden, cell):
    """Mirrors Decoder.forward (eval mode): returns (prediction, hidden, cell)."""
    n_layers, B, H = hidden.shape
    V, E = kparams["embedding"].shape

    kernel = _make_decoder_kernel(n_layers, B, H, E, V)

    grid_spec = pltpu.PrefetchScalarGridSpec(
        num_scalar_prefetch=1,                      # token_ids -> SMEM
        grid=(n_layers,),                           # one grid step per LSTM layer
        in_specs=[
            pl.BlockSpec((V, E), lambda l, tok: (0, 0)),               # embedding (loaded once)
            pl.BlockSpec((1, B, H), lambda l, tok: (l, 0, 0)),         # hidden[l]
            pl.BlockSpec((1, B, H), lambda l, tok: (l, 0, 0)),         # cell[l]
            pl.BlockSpec((1, E + H, 4 * H), lambda l, tok: (l, 0, 0)),  # fused weights[l]
            pl.BlockSpec((1, 1, 4 * H), lambda l, tok: (l, 0, 0)),     # fused bias[l]
            pl.BlockSpec((H, V), lambda l, tok: (0, 0)),               # fc_out weight
            pl.BlockSpec((1, V), lambda l, tok: (0, 0)),               # fc_out bias
        ],
        out_specs=(
            pl.BlockSpec((B, V), lambda l, tok: (0, 0)),               # prediction
            pl.BlockSpec((1, B, H), lambda l, tok: (l, 0, 0)),         # new hidden[l]
            pl.BlockSpec((1, B, H), lambda l, tok: (l, 0, 0)),         # new cell[l]
        ),
        scratch_shapes=[
            pltpu.VMEM((B, H), jnp.float32),        # activation carried across layers
        ],
    )

    pred, h_new, c_new = pl.pallas_call(
        kernel,
        grid_spec=grid_spec,
        out_shape=(
            jax.ShapeDtypeStruct((B, V), jnp.float32),
            jax.ShapeDtypeStruct((n_layers, B, H), jnp.float32),
            jax.ShapeDtypeStruct((n_layers, B, H), jnp.float32),
        ),
        compiler_params=pltpu.CompilerParams(
            dimension_semantics=("arbitrary",)),    # layers are sequentially dependent
    )(token_ids, kparams["embedding"], hidden, cell,
      kparams["w_cat"], kparams["b"], kparams["w_out_t"], kparams["b_out"])

    return pred, h_new, c_new


# ----------------------------- parameter init / prep ------------------------ #

def init_params(key, vocab_size, emb_dim, hid_dim, n_layers):
    """PyTorch-layout parameters (per-layer W_ih^T, W_hh^T, biases; gate order i,f,g,o)."""
    keys = jax.random.split(key, 3 + n_layers)
    bound = 1.0 / (hid_dim ** 0.5)

    params = {
        "embedding": jax.random.normal(keys[0], (vocab_size, emb_dim), jnp.float32),
        "w_out_t": jax.random.uniform(keys[1], (hid_dim, vocab_size), jnp.float32,
                                      -bound, bound),
        "b_out": jax.random.uniform(keys[2], (1, vocab_size), jnp.float32,
                                    -bound, bound),
        "w_ih_t": [], "w_hh_t": [], "b_ih": [], "b_hh": [],
    }
    for layer in range(n_layers):
        in_dim = emb_dim if layer == 0 else hid_dim
        k1, k2, k3, k4 = jax.random.split(keys[3 + layer], 4)
        params["w_ih_t"].append(
            jax.random.uniform(k1, (in_dim, 4 * hid_dim), jnp.float32, -bound, bound))
        params["w_hh_t"].append(
            jax.random.uniform(k2, (hid_dim, 4 * hid_dim), jnp.float32, -bound, bound))
        params["b_ih"].append(
            jax.random.uniform(k3, (1, 4 * hid_dim), jnp.float32, -bound, bound))
        params["b_hh"].append(
            jax.random.uniform(k4, (1, 4 * hid_dim), jnp.float32, -bound, bound))
    return params


def prepare_kernel_params(params, hid_dim):
    """Pack PyTorch-layout params into kernel layout:
       - fuse [W_ih^T ; W_hh^T] and (b_ih + b_hh) per layer,
       - permute gate columns (i,f,g,o) -> (i,f,o,g),
       - stack layers along a leading axis for per-layer streaming."""
    H = hid_dim

    def reorder_cols(w):   # columns i|f|g|o -> i|f|o|g
        return jnp.concatenate(
            [w[..., 0:2 * H], w[..., 3 * H:4 * H], w[..., 2 * H:3 * H]], axis=-1)

    w_cat = jnp.stack([
        reorder_cols(jnp.concatenate([wi, wh], axis=0))
        for wi, wh in zip(params["w_ih_t"], params["w_hh_t"])
    ])                                               # [n_layers, E+H, 4H]
    b = jnp.stack([
        reorder_cols(bi + bh)
        for bi, bh in zip(params["b_ih"], params["b_hh"])
    ])                                               # [n_layers, 1, 4H]

    return {
        "embedding": params["embedding"],
        "w_cat": w_cat,
        "b": b,
        "w_out_t": params["w_out_t"],
        "b_out": params["b_out"],
    }


# ----------------------------- pure-JAX reference --------------------------- #

def reference_forward(params, token_ids, hidden, cell):
    """Straight PyTorch-semantics reference (gate order i,f,g,o, separate matmuls)."""
    x = params["embedding"][token_ids]
    n_layers, _, H = hidden.shape
    new_h, new_c = [], []
    for layer in range(n_layers):
        gates = (x @ params["w_ih_t"][layer] + params["b_ih"][layer]
                 + hidden[layer] @ params["w_hh_t"][layer] + params["b_hh"][layer])
        i = jax.nn.sigmoid(gates[:, 0 * H:1 * H])
        f = jax.nn.sigmoid(gates[:, 1 * H:2 * H])
        g = jnp.tanh(gates[:, 2 * H:3 * H])
        o = jax.nn.sigmoid(gates[:, 3 * H:4 * H])
        c_l = f * cell[layer] + i * g
        h_l = o * jnp.tanh(c_l)
        new_h.append(h_l)
        new_c.append(c_l)
        x = h_l
    pred = x @ params["w_out_t"] + params["b_out"]
    return pred, jnp.stack(new_h), jnp.stack(new_c)


# ----------------------------- main ----------------------------------------- #

if __name__ == "__main__":
    # Lane-dense toy sizes: E = H = 128 lanes, V = 256, B = 8 sublanes, 2 layers.
    VOCAB, EMB, HID, NLAYERS, BATCH = 256, 128, 128, 2, 8

    key = jax.random.PRNGKey(0)
    k_params, k_tok, k_h, k_c = jax.random.split(key, 4)

    params = init_params(k_params, VOCAB, EMB, HID, NLAYERS)
    kparams = prepare_kernel_params(params, HID)

    token_ids = jax.random.randint(k_tok, (BATCH,), 0, VOCAB, dtype=jnp.int32)
    hidden = jax.random.normal(k_h, (NLAYERS, BATCH, HID), jnp.float32)
    cell = jax.random.normal(k_c, (NLAYERS, BATCH, HID), jnp.float32)

    decoder_step = jax.jit(decoder_forward)
    pred, h_new, c_new = jax.block_until_ready(
        decoder_step(kparams, token_ids, hidden, cell))

    pred_ref, h_ref, c_ref = reference_forward(params, token_ids, hidden, cell)

    assert pred.shape == (BATCH, VOCAB)
    assert h_new.shape == (NLAYERS, BATCH, HID)
    assert c_new.shape == (NLAYERS, BATCH, HID)
    assert jnp.allclose(pred, pred_ref, atol=1e-4, rtol=1e-4)
    assert jnp.allclose(h_new, h_ref, atol=1e-4, rtol=1e-4)
    assert jnp.allclose(c_new, c_ref, atol=1e-4, rtol=1e-4)

    print("KERNEL_OK")
</pallas_src>

<mosaic_0001>
module attributes {stable_mosaic.version = 11 : i64} {
  func.func @kernel(%arg0: i32, %arg1: memref<8xi32, #tpu.memory_space<smem>>, %arg2: memref<256x128xf32, #tpu.memory_space<vmem>>, %arg3: memref<1x8x128xf32, #tpu.memory_space<vmem>>, %arg4: memref<1x8x128xf32, #tpu.memory_space<vmem>>, %arg5: memref<1x256x512xf32, #tpu.memory_space<vmem>>, %arg6: memref<1x1x512xf32, #tpu.memory_space<vmem>>, %arg7: memref<128x256xf32, #tpu.memory_space<vmem>>, %arg8: memref<1x256xf32, #tpu.memory_space<vmem>>, %arg9: memref<8x256xf32, #tpu.memory_space<vmem>>, %arg10: memref<1x8x128xf32, #tpu.memory_space<vmem>>, %arg11: memref<1x8x128xf32, #tpu.memory_space<vmem>>, %arg12: memref<8x128xf32, #tpu.memory_space<vmem>>) attributes {dimension_semantics = [#tpu.dimension_semantics<arbitrary>], iteration_bounds = array<i64: 2>, scalar_prefetch = 1 : i64, scratch_operands = 1 : i64, tpu.core_type = #tpu.core_type<tc>, window_params = [{pipeline_mode = #tpu.pipeline_mode<synchronous>, transform_indices = @transform_0, window_bounds = array<i64: 256, 128>}, {transform_indices = @transform_1, window_bounds = array<i64: 1, 8, 128>}, {transform_indices = @transform_2, window_bounds = array<i64: 1, 8, 128>}, {transform_indices = @transform_3, window_bounds = array<i64: 1, 256, 512>}, {transform_indices = @transform_4, window_bounds = array<i64: 1, 1, 512>}, {pipeline_mode = #tpu.pipeline_mode<synchronous>, transform_indices = @transform_5, window_bounds = array<i64: 128, 256>}, {pipeline_mode = #tpu.pipeline_mode<synchronous>, transform_indices = @transform_6, window_bounds = array<i64: 1, 256>}, {pipeline_mode = #tpu.pipeline_mode<synchronous>, transform_indices = @transform_7, window_bounds = array<i64: 8, 256>}, {transform_indices = @transform_8, window_bounds = array<i64: 1, 8, 128>}, {transform_indices = @transform_9, window_bounds = array<i64: 1, 8, 128>}]} {
    %c0_i32 = arith.constant 0 : i32
    %0 = arith.cmpi eq, %arg0, %c0_i32 : i32
    %1 = arith.extui %0 : i1 to i32
    %c0_i32_0 = arith.constant 0 : i32
    %2 = arith.cmpi ne, %1, %c0_i32_0 : i32
    scf.if %2 {
      %c0_24 = arith.constant 0 : index
      %42 = memref.load %arg1[%c0_24] : memref<8xi32, #tpu.memory_space<smem>>
      %43 = arith.index_cast %42 : i32 to index
      %c0_25 = arith.constant 0 : index
      %44 = vector.load %arg2[%43, %c0_25] : memref<256x128xf32, #tpu.memory_space<vmem>>, vector<1x128xf32>
      %c0_26 = arith.constant 0 : index
      %c0_27 = arith.constant 0 : index
      %45 = vector.load %arg12[%c0_26, %c0_27] : memref<8x128xf32, #tpu.memory_space<vmem>>, vector<1x128xf32>
      tpu.vector_store %arg12[%c0_26, %c0_27], %44 {strides = array<i32>} : memref<8x128xf32, #tpu.memory_space<vmem>>, vector<1x128xf32>,
      %c1 = arith.constant 1 : index
      %46 = memref.load %arg1[%c1] : memref<8xi32, #tpu.memory_space<smem>>
      %47 = arith.index_cast %46 : i32 to index
      %c0_28 = arith.constant 0 : index
      %48 = vector.load %arg2[%47, %c0_28] : memref<256x128xf32, #tpu.memory_space<vmem>>, vector<1x128xf32>
      %c1_29 = arith.constant 1 : index
      %c0_30 = arith.constant 0 : index
      %49 = vector.load %arg12[%c1_29, %c0_30] : memref<8x128xf32, #tpu.memory_space<vmem>>, vector<1x128xf32>
      tpu.vector_store %arg12[%c1_29, %c0_30], %48 {strides = array<i32>} : memref<8x128xf32, #tpu.memory_space<vmem>>, vector<1x128xf32>,
      %c2 = arith.constant 2 : index
      %50 = memref.load %arg1[%c2] : memref<8xi32, #tpu.memory_space<smem>>
      %51 = arith.index_cast %50 : i32 to index
      %c0_31 = arith.constant 0 : index
      %52 = vector.load %arg2[%51, %c0_31] : memref<256x128xf32, #tpu.memory_space<vmem>>, vector<1x128xf32>
      %c2_32 = arith.constant 2 : index
      %c0_33 = arith.constant 0 : index
      %53 = vector.load %arg12[%c2_32, %c0_33] : memref<8x128xf32, #tpu.memory_space<vmem>>, vector<1x128xf32>
      tpu.vector_store %arg12[%c2_32, %c0_33], %52 {strides = array<i32>} : memref<8x128xf32, #tpu.memory_space<vmem>>, vector<1x128xf32>,
      %c3 = arith.constant 3 : index
      %54 = memref.load %arg1[%c3] : memref<8xi32, #tpu.memory_space<smem>>
      %55 = arith.index_cast %54 : i32 to index
      %c0_34 = arith.constant 0 : index
      %56 = vector.load %arg2[%55, %c0_34] : memref<256x128xf32, #tpu.memory_space<vmem>>, vector<1x128xf32>
      %c3_35 = arith.constant 3 : index
      %c0_36 = arith.constant 0 : index
      %57 = vector.load %arg12[%c3_35, %c0_36] : memref<8x128xf32, #tpu.memory_space<vmem>>, vector<1x128xf32>
      tpu.vector_store %arg12[%c3_35, %c0_36], %56 {strides = array<i32>} : memref<8x128xf32, #tpu.memory_space<vmem>>, vector<1x128xf32>,
      %c4 = arith.constant 4 : index
      %58 = memref.load %arg1[%c4] : memref<8xi32, #tpu.memory_space<smem>>
      %59 = arith.index_cast %58 : i32 to index
      %c0_37 = arith.constant 0 : index
      %60 = vector.load %arg2[%59, %c0_37] : memref<256x128xf32, #tpu.memory_space<vmem>>, vector<1x128xf32>
      %c4_38 = arith.constant 4 : index
      %c0_39 = arith.constant 0 : index
      %61 = vector.load %arg12[%c4_38, %c0_39] : memref<8x128xf32, #tpu.memory_space<vmem>>, vector<1x128xf32>
      tpu.vector_store %arg12[%c4_38, %c0_39], %60 {strides = array<i32>} : memref<8x128xf32, #tpu.memory_space<vmem>>, vector<1x128xf32>,
      %c5 = arith.constant 5 : index
      %62 = memref.load %arg1[%c5] : memref<8xi32, #tpu.memory_space<smem>>
      %63 = arith.index_cast %62 : i32 to index
      %c0_40 = arith.constant 0 : index
      %64 = vector.load %arg2[%63, %c0_40] : memref<256x128xf32, #tpu.memory_space<vmem>>, vector<1x128xf32>
      %c5_41 = arith.constant 5 : index
      %c0_42 = arith.constant 0 : index
      %65 = vector.load %arg12[%c5_41, %c0_42] : memref<8x128xf32, #tpu.memory_space<vmem>>, vector<1x128xf32>
      tpu.vector_store %arg12[%c5_41, %c0_42], %64 {strides = array<i32>} : memref<8x128xf32, #tpu.memory_space<vmem>>, vector<1x128xf32>,
      %c6 = arith.constant 6 : index
      %66 = memref.load %arg1[%c6] : memref<8xi32, #tpu.memory_space<smem>>
      %67 = arith.index_cast %66 : i32 to index
      %c0_43 = arith.constant 0 : index
      %68 = vector.load %arg2[%67, %c0_43] : memref<256x128xf32, #tpu.memory_space<vmem>>, vector<1x128xf32>
      %c6_44 = arith.constant 6 : index
      %c0_45 = arith.constant 0 : index
      %69 = vector.load %arg12[%c6_44, %c0_45] : memref<8x128xf32, #tpu.memory_space<vmem>>, vector<1x128xf32>
      tpu.vector_store %arg12[%c6_44, %c0_45], %68 {strides = array<i32>} : memref<8x128xf32, #tpu.memory_space<vmem>>, vector<1x128xf32>,
      %c7 = arith.constant 7 : index
      %70 = memref.load %arg1[%c7] : memref<8xi32, #tpu.memory_space<smem>>
      %71 = arith.index_cast %70 : i32 to index
      %c0_46 = arith.constant 0 : index
      %72 = vector.load %arg2[%71, %c0_46] : memref<256x128xf32, #tpu.memory_space<vmem>>, vector<1x128xf32>
      %c7_47 = arith.constant 7 : index
      %c0_48 = arith.constant 0 : index
      %73 = vector.load %arg12[%c7_47, %c0_48] : memref<8x128xf32, #tpu.memory_space<vmem>>, vector<1x128xf32>
      tpu.vector_store %arg12[%c7_47, %c0_48], %72 {strides = array<i32>} : memref<8x128xf32, #tpu.memory_space<vmem>>, vector<1x128xf32>,
    } else {
    }
    %c0 = arith.constant 0 : index
    %c0_1 = arith.constant 0 : index
    %c0_2 = arith.constant 0 : index
    %3 = vector.load %arg3[%c0, %c0_1, %c0_2] : memref<1x8x128xf32, #tpu.memory_space<vmem>>, vector<1x8x128xf32>
    %4 = vector.shape_cast %3 : vector<1x8x128xf32> to vector<8x128xf32>
    %c0_3 = arith.constant 0 : index
    %c0_4 = arith.constant 0 : index
    %c0_5 = arith.constant 0 : index
    %5 = vector.load %arg4[%c0_3, %c0_4, %c0_5] : memref<1x8x128xf32, #tpu.memory_space<vmem>>, vector<1x8x128xf32>
    %6 = vector.shape_cast %5 : vector<1x8x128xf32> to vector<8x128xf32>
    %c0_6 = arith.constant 0 : index
    %c0_7 = arith.constant 0 : index
    %7 = vector.load %arg12[%c0_6, %c0_7] : memref<8x128xf32, #tpu.memory_space<vmem>>, vector<8x128xf32>
    %8 = tpu.concatenate %7, %4 in 1 : vector<8x128xf32>, vector<8x128xf32> -> vector<8x256xf32>
    %c0_8 = arith.constant 0 : index
    %c0_9 = arith.constant 0 : index
    %c0_10 = arith.constant 0 : index
    %9 = vector.load %arg5[%c0_8, %c0_9, %c0_10] : memref<1x256x512xf32, #tpu.memory_space<vmem>>, vector<1x256x512xf32>
    %10 = vector.shape_cast %9 : vector<1x256x512xf32> to vector<256x512xf32>
    %cst = arith.constant dense<0.000000e+00> : vector<8x512xf32>
    %11 = tpu.matmul %8, %10, %cst {dimension_numbers = #tpu.dot_dimension_numbers<[1], [0], [0], [1], [0, 0, 1, 1], [], []>} : vector<8x256xf32>, vector<256x512xf32>, vector<8x512xf32> -> vector<8x512xf32>
    %c0_11 = arith.constant 0 : index
    %c0_12 = arith.constant 0 : index
    %c0_13 = arith.constant 0 : index
    %12 = vector.load %arg6[%c0_11, %c0_12, %c0_13] : memref<1x1x512xf32, #tpu.memory_space<vmem>>, vector<1x1x512xf32>
    %13 = vector.shape_cast %12 : vector<1x1x512xf32> to vector<1x512xf32>
    %14 = vector.broadcast %13 : vector<1x512xf32> to vector<8x512xf32>
    %15 = arith.addf %11, %14 : vector<8x512xf32>
    %16 = vector.extract_strided_slice %15 {offsets = [0, 0], sizes = [8, 384], strides = [1, 1]} : vector<8x512xf32> to vector<8x384xf32>
    %17 = arith.negf %16 : vector<8x384xf32>
    %18 = math.exp %17 : vector<8x384xf32>
    %cst_14 = arith.constant 1.000000e+00 : f32
    %19 = vector.broadcast %cst_14 : f32 to vector<8x384xf32>
    %20 = arith.addf %19, %18 : vector<8x384xf32>
    %21 = arith.divf %19, %20 : vector<8x384xf32>
    %22 = vector.extract_strided_slice %15 {offsets = [0, 384], sizes = [8, 128], strides = [1, 1]} : vector<8x512xf32> to vector<8x128xf32>
    %23 = math.tanh %22 : vector<8x128xf32>
    %24 = vector.extract_strided_slice %21 {offsets = [0, 0], sizes = [8, 128], strides = [1, 1]} : vector<8x384xf32> to vector<8x128xf32>
    %25 = vector.extract_strided_slice %21 {offsets = [0, 128], sizes = [8, 128], strides = [1, 1]} : vector<8x384xf32> to vector<8x128xf32>
    %26 = vector.extract_strided_slice %21 {offsets = [0, 256], sizes = [8, 128], strides = [1, 1]} : vector<8x384xf32> to vector<8x128xf32>
    %27 = arith.mulf %25, %6 : vector<8x128xf32>
    %28 = arith.mulf %24, %23 : vector<8x128xf32>
    %29 = arith.addf %27, %28 : vector<8x128xf32>
    %30 = math.tanh %29 : vector<8x128xf32>
    %31 = arith.mulf %26, %30 : vector<8x128xf32>
    %c0_15 = arith.constant 0 : index
    %c0_16 = arith.constant 0 : index
    %c0_17 = arith.constant 0 : index
    %32 = vector.load %arg10[%c0_15, %c0_16, %c0_17] : memref<1x8x128xf32, #tpu.memory_space<vmem>>, vector<1x8x128xf32>
    %33 = vector.shape_cast %32 : vector<1x8x128xf32> to vector<8x128xf32>
    %34 = vector.shape_cast %31 : vector<8x128xf32> to vector<1x8x128xf32>
    tpu.vector_store %arg10[%c0_15, %c0_16, %c0_17], %34 {strides = array<i32>} : memref<1x8x128xf32, #tpu.memory_space<vmem>>, vector<1x8x128xf32>,
    %c0_18 = arith.constant 0 : index
    %c0_19 = arith.constant 0 : index
    %c0_20 = arith.constant 0 : index
    %35 = vector.load %arg11[%c0_18, %c0_19, %c0_20] : memref<1x8x128xf32, #tpu.memory_space<vmem>>, vector<1x8x128xf32>
    %36 = vector.shape_cast %35 : vector<1x8x128xf32> to vector<8x128xf32>
    %37 = vector.shape_cast %29 : vector<8x128xf32> to vector<1x8x128xf32>
    tpu.vector_store %arg11[%c0_18, %c0_19, %c0_20], %37 {strides = array<i32>} : memref<1x8x128xf32, #tpu.memory_space<vmem>>, vector<1x8x128xf32>,
    %c0_21 = arith.constant 0 : index
    %c0_22 = arith.constant 0 : index
    %38 = vector.load %arg12[%c0_21, %c0_22] : memref<8x128xf32, #tpu.memory_space<vmem>>, vector<8x128xf32>
    tpu.vector_store %arg12[%c0_21, %c0_22], %31 {strides = array<i32>} : memref<8x128xf32, #tpu.memory_space<vmem>>, vector<8x128xf32>,
    %c1_i32 = arith.constant 1 : i32
    %39 = arith.cmpi eq, %arg0, %c1_i32 : i32
    %40 = arith.extui %39 : i1 to i32
    %c0_i32_23 = arith.constant 0 : i32
    %41 = arith.cmpi ne, %40, %c0_i32_23 : i32
    scf.if %41 {
      %c0_24 = arith.constant 0 : index
      %c0_25 = arith.constant 0 : index
      %42 = vector.load %arg7[%c0_24, %c0_25] : memref<128x256xf32, #tpu.memory_space<vmem>>, vector<128x256xf32>
      %cst_26 = arith.constant dense<0.000000e+00> : vector<8x256xf32>
      %43 = tpu.matmul %31, %42, %cst_26 {dimension_numbers = #tpu.dot_dimension_numbers<[1], [0], [0], [1], [0, 0, 1, 1], [], []>} : vector<8x128xf32>, vector<128x256xf32>, vector<8x256xf32> -> vector<8x256xf32>
      %c0_27 = arith.constant 0 : index
      %c0_28 = arith.constant 0 : index
      %44 = vector.load %arg8[%c0_27, %c0_28] : memref<1x256xf32, #tpu.memory_space<vmem>>, vector<1x256xf32>
      %45 = vector.broadcast %44 : vector<1x256xf32> to vector<8x256xf32>
      %46 = arith.addf %43, %45 : vector<8x256xf32>
      %c0_29 = arith.constant 0 : index
      %c0_30 = arith.constant 0 : index
      %47 = vector.load %arg9[%c0_29, %c0_30] : memref<8x256xf32, #tpu.memory_space<vmem>>, vector<8x256xf32>
      tpu.vector_store %arg9[%c0_29, %c0_30], %46 {strides = array<i32>} : memref<8x256xf32, #tpu.memory_space<vmem>>, vector<8x256xf32>,
    } else {
    }
    return
  }
  func.func @transform_0(%arg0: i32, %arg1: memref<8xi32, #tpu.memory_space<smem>>) -> (i32, i32) {
    %c0_i32 = arith.constant 0 : i32
    %c0_i32_0 = arith.constant 0 : i32
    %c0_i32_1 = arith.constant 0 : i32
    return %c0_i32, %c0_i32_0 : i32, i32
  }
  func.func @transform_1(%arg0: i32, %arg1: memref<8xi32, #tpu.memory_space<smem>>) -> (i32, i32, i32) {
    %c0_i32 = arith.constant 0 : i32
    %c0_i32_0 = arith.constant 0 : i32
    %c0_i32_1 = arith.constant 0 : i32
    return %arg0, %c0_i32, %c0_i32_0 : i32, i32, i32
  }
  func.func @transform_2(%arg0: i32, %arg1: memref<8xi32, #tpu.memory_space<smem>>) -> (i32, i32, i32) {
    %c0_i32 = arith.constant 0 : i32
    %c0_i32_0 = arith.constant 0 : i32
    %c0_i32_1 = arith.constant 0 : i32
    return %arg0, %c0_i32, %c0_i32_0 : i32, i32, i32
  }
  func.func @transform_3(%arg0: i32, %arg1: memref<8xi32, #tpu.memory_space<smem>>) -> (i32, i32, i32) {
    %c0_i32 = arith.constant 0 : i32
    %c0_i32_0 = arith.constant 0 : i32
    %c0_i32_1 = arith.constant 0 : i32
    return %arg0, %c0_i32, %c0_i32_0 : i32, i32, i32
  }
  func.func @transform_4(%arg0: i32, %arg1: memref<8xi32, #tpu.memory_space<smem>>) -> (i32, i32, i32) {
    %c0_i32 = arith.constant 0 : i32
    %c0_i32_0 = arith.constant 0 : i32
    %c0_i32_1 = arith.constant 0 : i32
    return %arg0, %c0_i32, %c0_i32_0 : i32, i32, i32
  }
  func.func @transform_5(%arg0: i32, %arg1: memref<8xi32, #tpu.memory_space<smem>>) -> (i32, i32) {
    %c0_i32 = arith.constant 0 : i32
    %c0_i32_0 = arith.constant 0 : i32
    %c0_i32_1 = arith.constant 0 : i32
    return %c0_i32, %c0_i32_0 : i32, i32
  }
  func.func @transform_6(%arg0: i32, %arg1: memref<8xi32, #tpu.memory_space<smem>>) -> (i32, i32) {
    %c0_i32 = arith.constant 0 : i32
    %c0_i32_0 = arith.constant 0 : i32
    %c0_i32_1 = arith.constant 0 : i32
    return %c0_i32, %c0_i32_0 : i32, i32
  }
  func.func @transform_7(%arg0: i32, %arg1: memref<8xi32, #tpu.memory_space<smem>>) -> (i32, i32) {
    %c0_i32 = arith.constant 0 : i32
    %c0_i32_0 = arith.constant 0 : i32
    %c0_i32_1 = arith.constant 0 : i32
    return %c0_i32, %c0_i32_0 : i32, i32
  }
  func.func @transform_8(%arg0: i32, %arg1: memref<8xi32, #tpu.memory_space<smem>>) -> (i32, i32, i32) {
    %c0_i32 = arith.constant 0 : i32
    %c0_i32_0 = arith.constant 0 : i32
    %c0_i32_1 = arith.constant 0 : i32
    return %arg0, %c0_i32, %c0_i32_0 : i32, i32, i32
  }
  func.func @transform_9(%arg0: i32, %arg1: memref<8xi32, #tpu.memory_space<smem>>) -> (i32, i32, i32) {
    %c0_i32 = arith.constant 0 : i32
    %c0_i32_0 = arith.constant 0 : i32
    %c0_i32_1 = arith.constant 0 : i32
    return %arg0, %c0_i32, %c0_i32_0 : i32, i32, i32
  }
}

</mosaic_0001>

<llo_original>
// kernel: decoder_forward.1
$region0: #{decoder_forward.1}
  #allocation0 [shape = 'u32[]', space=smem, size = 0x4, offset = 0x4, fixed_abs, tag = 'smem constant byte address 0x4 - core index']
  #allocation1 [shape = 'u32[144,128]{1,0:T(1,128)}', space=vmem, size = 0x12000, scoped, tag = 'internal scratch']
  #allocation2 [shape = 'f32[8,128]{1,0:T(8,128)}', space=vmem, size = 0x1000, scoped, tag = 'scratch operand']
  #allocation3 [shape = 's32[1]{0}', space=sflag, size = 0x4, scoped, tag = 'scoped memory for decoder_forward.1']
  #allocation4 [shape = 'u8[512]{0}', space=smem, size = 0x200, scoped, tag = 'prefetched SMEM operand 0']
  %s0 = inlined_call_operand.vmem [shape: s32[8], index: 0, kind: input, shape index: {}]
  %s1 = inlined_call_operand.hbm [shape: f32[256,128], index: 1, kind: input, shape index: {}]
  %s2 = inlined_call_operand.vmem [shape: f32[2,8,128], index: 2, kind: input, shape index: {}]
  %s3 = inlined_call_operand.hbm [shape: f32[2,8,128], index: 3, kind: input, shape index: {}]
  %s4 = inlined_call_operand.hbm [shape: f32[2,256,512], index: 4, kind: input, shape index: {}]
  %s5 = inlined_call_operand.hbm [shape: f32[2,1,512], index: 5, kind: input, shape index: {}]
  %s6 = inlined_call_operand.hbm [shape: f32[128,256], index: 6, kind: input, shape index: {}]
  %s7 = inlined_call_operand.vmem [shape: f32[1,256], index: 7, kind: input, shape index: {}]
  %s8 = inlined_call_operand.hbm [shape: f32[8,256], index: 8, kind: output, shape index: {0}]
  %s9 = inlined_call_operand.hbm [shape: f32[2,8,128], index: 9, kind: output, shape index: {1}]
  %s10 = inlined_call_operand.hbm [shape: f32[2,8,128], index: 10, kind: output, shape index: {2}]
  %11 = xla_tuple %s8, %s9, %s10
  %s12 = sld [smem:[#allocation0]]
  $region105: #{decoder_forward.1} parent=0
    _
  %s14 = ssub.s32 1, %s12
  %s15 = scalar_select 0, %s14, %s12
  %s16 = sshll.u32 %s0, 4
  %s17 = int_to_ptr.vmem [resolvable:$true] %s16
  %19 = dma.vmem_to_smem %s17, 16, [#allocation4], [#allocation3]
  %20 = dma.done [#allocation3], 16
  %21 = sfence
  $region1: #{decoder_forward.1} parent=0
    #allocation5 [shape = 'u8[131072]{0}', space=vmem, size = 0x20000, scoped, tag = 'input window, operand 1, single buffered']
    #allocation6 [shape = 's32[2]{0}', space=sflag, size = 0x8, scoped, tag = 'scoped memory for decoder_forward.1']
    #allocation7 [shape = 's32[2]{0}', space=sflag, size = 0x8, scoped, tag = 'scoped memory for decoder_forward.1']
    #allocation8 [shape = 'u8[8192]{0}', space=vmem, size = 0x2000, scoped, tag = 'input window, operand 3']
    #allocation9 [shape = 's32[2]{0}', space=sflag, size = 0x8, scoped, tag = 'scoped memory for decoder_forward.1']
    #allocation10 [shape = 'u8[1048576]{0}', space=vmem, size = 0x100000, scoped, tag = 'input window, operand 4']
    #allocation11 [shape = 'u8[4096]{0}', space=vmem, size = 0x1000, scoped, tag = 'input window, operand 5']
    #allocation12 [shape = 's32[2]{0}', space=sflag, size = 0x8, scoped, tag = 'scoped memory for decoder_forward.1']
    #allocation13 [shape = 'u8[131072]{0}', space=vmem, size = 0x20000, scoped, tag = 'input window, operand 6, single buffered']
    #allocation14 [shape = 'u8[8192]{0}', space=vmem, size = 0x2000, scoped, tag = 'output window, operand 0, single buffered']
    #allocation15 [shape = 'u8[8192]{0}', space=vmem, size = 0x2000, scoped, tag = 'output window, operand 1']
    #allocation16 [shape = 's32[2]{0}', space=sflag, size = 0x8, scoped, tag = 'scoped memory for decoder_forward.1']
    #allocation17 [shape = 'u8[8192]{0}', space=vmem, size = 0x2000, scoped, tag = 'output window, operand 2']
    %22 = vsyncpa [#allocation6], 0
    %23 = vsyncpa [#allocation9], 0
    %s24 = scalar_lea.sflag [#allocation9], 1
    %25 = vsyncpa %s24, 0
    %26 = vsyncpa [#allocation12], 0
    %s27 = scalar_lea.sflag [#allocation12], 1
    %28 = vsyncpa %s27, 0
    %29 = vsyncpa [#allocation7], 0
    %30 = vsyncpa [#allocation16], 0
    %s31 = scalar_lea.sflag [#allocation16], 1
    %32 = vsyncpa %s31, 0
    loop: start=0, step=1, limit=4
    $region2: #{decoder_forward.1} parent=1 // loop_pre_header
      _
    $region3: #{decoder_forward.1} parent=1 // loop_header
      %s34 = sphi 0, %s38
      %p35 = scmp.ge.s32.totalorder %s34, 4
      %s42 = sphi 0, %s42
      %s44 = sphi 0, %s42
      %s45 = sphi 0, %s44
      %s59 = sphi 0, %s45
      %s65 = sphi 0, %s67
      %s68 = sphi 0, %s65
      %s69 = sphi 0, %s68
      %s85 = sphi 0, %s69
      %s91 = sphi 0, %s93
      %s94 = sphi 0, %s91
      %s95 = sphi 0, %s94
      %s111 = sphi 0, %s95
      %s117 = sphi 0, %s119
      %s120 = sphi 0, %s117
      %s121 = sphi 0, %s120
      %s137 = sphi 0, %s121
      %s143 = sphi 0, %s145
      %s146 = sphi 0, %s143
      %s147 = sphi 0, %s146
      %s163 = sphi 0, %s147
      %s167 = sphi 0, %s167
      %s169 = sphi 0, %s167
      %s170 = sphi 0, %s169
      %s184 = sphi 0, %s170
      %s188 = sphi 0, %s188
      %s190 = sphi 0, %s188
      %s191 = sphi 0, %s190
      %s205 = sphi 0, %s191
      %s209 = sphi 0, %s209
      %s211 = sphi 0, %s209
      %s212 = sphi 0, %s211
      %s226 = sphi 0, %s212
      %s232 = sphi 0, %s234
      %s235 = sphi 0, %s232
      %s236 = sphi 0, %s235
      %s252 = sphi 0, %s236
      %s258 = sphi 0, %s260
      %s261 = sphi 0, %s258
      %s262 = sphi 0, %s261
      %s278 = sphi 0, %s262
    $region4: #{decoder_forward.1} parent=1 // loop_header_branch
      %37 = sbr.rel (%p35) target = $region8
    $region5: #{decoder_forward.1} parent=1 // loop_body
      %s39 = ssub.s32 %s34, 1
      %s40 = ssub.s32 %s34, 2
      %s41 = sadd.s32 %s34, 1
      %s43 = sadd.s32 %s42, 1
      %p46 = scmp.eq.s32.totalorder %s34, 1
      %p47 = scmp.ne.s32.totalorder %s42, %s44
      %p48 = scmp.eq.s32.totalorder %s34, 0
      %p49 = por %p47, %p48
      %p50 = scmp.ne.s32.totalorder %s42, %s44
      %p51 = scmp.eq.s32.totalorder %s39, 1
      %p52 = por %p50, %p51
      %p53 = scmp.ne.s32.totalorder %s44, %s45
      %p54 = scmp.eq.s32.totalorder %s39, 0
      %p55 = por %p53, %p54
      %p56 = scmp.ne.s32.totalorder %s44, %s45
      %p57 = scmp.eq.s32.totalorder %s40, 1
      %p58 = por %p56, %p57
      %p60 = scmp.ne.s32.totalorder %s45, %s59
      %p61 = scmp.eq.s32.totalorder %s40, 0
      %p62 = por %p60, %p61
      %s63 = ssub.s32 %s34, %s41
      %p64 = scmp.eq.s32.totalorder %s63, 0
      %s66 = sadd.s32 %s65, 1
      %s67 = scalar_select %p64, %s65, %s66
      %p70 = pneg %p64
      %p71 = scmp.eq.s32.totalorder %s34, 1
      %p72 = por %p70, %p71
      %p73 = scmp.ne.s32.totalorder %s65, %s68
      %p74 = scmp.eq.s32.totalorder %s34, 0
      %p75 = por %p73, %p74
      %p76 = scmp.ne.s32.totalorder %s65, %s68
      %p77 = scmp.eq.s32.totalorder %s39, 1
      %p78 = por %p76, %p77
      %p79 = scmp.ne.s32.totalorder %s68, %s69
      %p80 = scmp.eq.s32.totalorder %s39, 0
      %p81 = por %p79, %p80
      %p82 = scmp.ne.s32.totalorder %s68, %s69
      %p83 = scmp.eq.s32.totalorder %s40, 1
      %p84 = por %p82, %p83
      %p86 = scmp.ne.s32.totalorder %s69, %s85
      %p87 = scmp.eq.s32.totalorder %s40, 0
      %p88 = por %p86, %p87
      %s89 = ssub.s32 %s34, %s41
      %p90 = scmp.eq.s32.totalorder %s89, 0
      %s92 = sadd.s32 %s91, 1
      %s93 = scalar_select %p90, %s91, %s92
      %p96 = pneg %p90
      %p97 = scmp.eq.s32.totalorder %s34, 1
      %p98 = por %p96, %p97
      %p99 = scmp.ne.s32.totalorder %s91, %s94
      %p100 = scmp.eq.s32.totalorder %s34, 0
      %p101 = por %p99, %p100
      %p102 = scmp.ne.s32.totalorder %s91, %s94
      %p103 = scmp.eq.s32.totalorder %s39, 1
      %p104 = por %p102, %p103
      %p105 = scmp.ne.s32.totalorder %s94, %s95
      %p106 = scmp.eq.s32.totalorder %s39, 0
      %p107 = por %p105, %p106
      %p108 = scmp.ne.s32.totalorder %s94, %s95
      %p109 = scmp.eq.s32.totalorder %s40, 1
      %p110 = por %p108, %p109
      %p112 = scmp.ne.s32.totalorder %s95, %s111
      %p113 = scmp.eq.s32.totalorder %s40, 0
      %p114 = por %p112, %p113
      %s115 = ssub.s32 %s34, %s41
      %p116 = scmp.eq.s32.totalorder %s115, 0
      %s118 = sadd.s32 %s117, 1
      %s119 = scalar_select %p116, %s117, %s118
      %p122 = pneg %p116
      %p123 = scmp.eq.s32.totalorder %s34, 1
      %p124 = por %p122, %p123
      %p125 = scmp.ne.s32.totalorder %s117, %s120
      %p126 = scmp.eq.s32.totalorder %s34, 0
      %p127 = por %p125, %p126
      %p128 = scmp.ne.s32.totalorder %s117, %s120
      %p129 = scmp.eq.s32.totalorder %s39, 1
      %p130 = por %p128, %p129
      %p131 = scmp.ne.s32.totalorder %s120, %s121
      %p132 = scmp.eq.s32.totalorder %s39, 0
      %p133 = por %p131, %p132
      %p134 = scmp.ne.s32.totalorder %s120, %s121
      %p135 = scmp.eq.s32.totalorder %s40, 1
      %p136 = por %p134, %p135
      %p138 = scmp.ne.s32.totalorder %s121, %s137
      %p139 = scmp.eq.s32.totalorder %s40, 0
      %p140 = por %p138, %p139
      %s141 = ssub.s32 %s34, %s41
      %p142 = scmp.eq.s32.totalorder %s141, 0
      %s144 = sadd.s32 %s143, 1
      %s145 = scalar_select %p142, %s143, %s144
      %p148 = pneg %p142
      %p149 = scmp.eq.s32.totalorder %s34, 1
      %p150 = por %p148, %p149
      %p151 = scmp.ne.s32.totalorder %s143, %s146
      %p152 = scmp.eq.s32.totalorder %s34, 0
      %p153 = por %p151, %p152
      %p154 = scmp.ne.s32.totalorder %s143, %s146
      %p155 = scmp.eq.s32.totalorder %s39, 1
      %p156 = por %p154, %p155
      %p157 = scmp.ne.s32.totalorder %s146, %s147
      %p158 = scmp.eq.s32.totalorder %s39, 0
      %p159 = por %p157, %p158
      %p160 = scmp.ne.s32.totalorder %s146, %s147
      %p161 = scmp.eq.s32.totalorder %s40, 1
      %p162 = por %p160, %p161
      %p164 = scmp.ne.s32.totalorder %s147, %s163
      %p165 = scmp.eq.s32.totalorder %s40, 0
      %p166 = por %p164, %p165
      %s168 = sadd.s32 %s167, 1
      %p171 = scmp.eq.s32.totalorder %s34, 1
      %p172 = scmp.ne.s32.totalorder %s167, %s169
      %p173 = scmp.eq.s32.totalorder %s34, 0
      %p174 = por %p172, %p173
      %p175 = scmp.ne.s32.totalorder %s167, %s169
      %p176 = scmp.eq.s32.totalorder %s39, 1
      %p177 = por %p175, %p176
      %p178 = scmp.ne.s32.totalorder %s169, %s170
      %p179 = scmp.eq.s32.totalorder %s39, 0
      %p180 = por %p178, %p179
      %p181 = scmp.ne.s32.totalorder %s169, %s170
      %p182 = scmp.eq.s32.totalorder %s40, 1
      %p183 = por %p181, %p182
      %p185 = scmp.ne.s32.totalorder %s170, %s184
      %p186 = scmp.eq.s32.totalorder %s40, 0
      %p187 = por %p185, %p186
      %s189 = sadd.s32 %s188, 1
      %p192 = scmp.eq.s32.totalorder %s34, 1
      %p193 = scmp.ne.s32.totalorder %s188, %s190
      %p194 = scmp.eq.s32.totalorder %s34, 0
      %p195 = por %p193, %p194
      %p196 = scmp.ne.s32.totalorder %s188, %s190
      %p197 = scmp.eq.s32.totalorder %s39, 1
      %p198 = por %p196, %p197
      %p199 = scmp.ne.s32.totalorder %s190, %s191
      %p200 = scmp.eq.s32.totalorder %s39, 0
      %p201 = por %p199, %p200
      %p202 = scmp.ne.s32.totalorder %s190, %s191
      %p203 = scmp.eq.s32.totalorder %s40, 1
      %p204 = por %p202, %p203
      %p206 = scmp.ne.s32.totalorder %s191, %s205
      %p207 = scmp.eq.s32.totalorder %s40, 0
      %p208 = por %p206, %p207
      %s210 = sadd.s32 %s209, 1
      %p213 = scmp.eq.s32.totalorder %s34, 1
      %p214 = scmp.ne.s32.totalorder %s209, %s211
      %p215 = scmp.eq.s32.totalorder %s34, 0
      %p216 = por %p214, %p215
      %p217 = scmp.ne.s32.totalorder %s209, %s211
      %p218 = scmp.eq.s32.totalorder %s39, 1
      %p219 = por %p217, %p218
      %p220 = scmp.ne.s32.totalorder %s211, %s212
      %p221 = scmp.eq.s32.totalorder %s39, 0
      %p222 = por %p220, %p221
      %p223 = scmp.ne.s32.totalorder %s211, %s212
      %p224 = scmp.eq.s32.totalorder %s40, 1
      %p225 = por %p223, %p224
      %p227 = scmp.ne.s32.totalorder %s212, %s226
      %p228 = scmp.eq.s32.totalorder %s40, 0
      %p229 = por %p227, %p228
      %s230 = ssub.s32 %s34, %s41
      %p231 = scmp.eq.s32.totalorder %s230, 0
      %s233 = sadd.s32 %s232, 1
      %s234 = scalar_select %p231, %s232, %s233
      %p237 = pneg %p231
      %p238 = scmp.eq.s32.totalorder %s34, 1
      %p239 = por %p237, %p238
      %p240 = scmp.ne.s32.totalorder %s232, %s235
      %p241 = scmp.eq.s32.totalorder %s34, 0
      %p242 = por %p240, %p241
      %p243 = scmp.ne.s32.totalorder %s232, %s235
      %p244 = scmp.eq.s32.totalorder %s39, 1
      %p245 = por %p243, %p244
      %p246 = scmp.ne.s32.totalorder %s235, %s236
      %p247 = scmp.eq.s32.totalorder %s39, 0
      %p248 = por %p246, %p247
      %p249 = scmp.ne.s32.totalorder %s235, %s236
      %p250 = scmp.eq.s32.totalorder %s40, 1
      %p251 = por %p249, %p250
      %p253 = scmp.ne.s32.totalorder %s236, %s252
      %p254 = scmp.eq.s32.totalorder %s40, 0
      %p255 = por %p253, %p254
      %s256 = ssub.s32 %s34, %s41
      %p257 = scmp.eq.s32.totalorder %s256, 0
      %s259 = sadd.s32 %s258, 1
      %s260 = scalar_select %p257, %s258, %s259
      %p263 = pneg %p257
      %p264 = scmp.eq.s32.totalorder %s34, 1
      %p265 = por %p263, %p264
      %p266 = scmp.ne.s32.totalorder %s258, %s261
      %p267 = scmp.eq.s32.totalorder %s34, 0
      %p268 = por %p266, %p267
      %p269 = scmp.ne.s32.totalorder %s258, %s261
      %p270 = scmp.eq.s32.totalorder %s39, 1
      %p271 = por %p269, %p270
      %p272 = scmp.ne.s32.totalorder %s261, %s262
      %p273 = scmp.eq.s32.totalorder %s39, 0
      %p274 = por %p272, %p273
      %p275 = scmp.ne.s32.totalorder %s261, %s262
      %p276 = scmp.eq.s32.totalorder %s40, 1
      %p277 = por %p275, %p276
      %p279 = scmp.ne.s32.totalorder %s262, %s278
      %p280 = scmp.eq.s32.totalorder %s40, 0
      %p281 = por %p279, %p280
      %p282 = scmp.le.s32.totalorder 1, %s34
      %p283 = scmp.lt.s32.totalorder %s34, 3
      %p284 = pnand %p282, %p283
      %p285 = pneg %p284
      // Predicated region
      $region9: #{decoder_forward.1} parent=5 // pred_check
        _
      $region10: #{decoder_forward.1} parent=5 // pred_check_branch
        %287 = sbr.rel (%p284) target = $region12
      $region11: #{decoder_forward.1} parent=5 // pred_region
        %s288 = ssub.s32 %s34, 1
        // Predicated region
        $region13: #{decoder_forward.1} parent=11 // pred_check
          %p289 = pneg %p55
        $region14: #{decoder_forward.1} parent=11 // pred_check_branch
          %291 = sbr.rel (%p289) target = $region16
        $region15: #{decoder_forward.1} parent=11 // pred_region
          %s293 = ssub.s32 4096, 4096
          %294 = vsyncadd [#allocation6], %s293
          %s295 = sshll.u32 [#allocation5], 4
          %s296 = int_to_ptr.vmem [resolvable:$true] %s295
          %301 = dma.hbm_to_vmem [thread:$0]  %s1, 4096, %s296, [#allocation6], 128, 128, 8
        $region16: #{decoder_forward.1} parent=11 // pred_fallthru
          _
        // Predicated region
        $region17: #{decoder_forward.1} parent=11 // pred_check
          %p302 = pneg %p180
        $region18: #{decoder_forward.1} parent=11 // pred_check_branch
          %304 = sbr.rel (%p302) target = $region20
        $region19: #{decoder_forward.1} parent=11 // pred_region
          %s306 = ssub.s32 4096, 4096
          %307 = vsyncadd [#allocation12], %s306
          %s308 = sshll.u32 [#allocation13], 4
          %s309 = int_to_ptr.vmem [resolvable:$true] %s308
          %314 = dma.hbm_to_vmem [thread:$0]  %s6, 4096, %s309, [#allocation12], 256, 256, 16
        $region20: #{decoder_forward.1} parent=11 // pred_fallthru
          _
        // Predicated region
        $region21: #{decoder_forward.1} parent=11 // pred_check
          %p315 = pneg %p201
        $region22: #{decoder_forward.1} parent=11 // pred_check_branch
          %317 = sbr.rel (%p315) target = $region24
        $region23: #{decoder_forward.1} parent=11 // pred_region
          _
        $region24: #{decoder_forward.1} parent=11 // pred_fallthru
          _
      $region12: #{decoder_forward.1} parent=5 // pred_fallthru
        _
      %p318 = scmp.lt.s32.totalorder %s34, 2
      // Predicated region
      $region25: #{decoder_forward.1} parent=5 // pred_check
        %p319 = pneg %p318
      $region26: #{decoder_forward.1} parent=5 // pred_check_branch
        %321 = sbr.rel (%p319) target = $region28
      $region27: #{decoder_forward.1} parent=5 // pred_region
        // Predicated region
        $region29: #{decoder_forward.1} parent=27 // pred_check
          %p322 = pneg %p75
        $region30: #{decoder_forward.1} parent=27 // pred_check_branch
          %324 = sbr.rel (%p322) target = $region32
        $region31: #{decoder_forward.1} parent=27 // pred_region
          %p325 = scmp.lt.s32.totalorder %s34, 1
          %s326 = scalar_select %p325, %s34, 1
          %s327 = smul.addr %s326, 8
          %s328 = scalar_lea.vmem %s2, %s327
        $region32: #{decoder_forward.1} parent=27 // pred_fallthru
          _
        // Predicated region
        $region33: #{decoder_forward.1} parent=27 // pred_check
          %p329 = pneg %p101
        $region34: #{decoder_forward.1} parent=27 // pred_check_branch
          %331 = sbr.rel (%p329) target = $region36
        $region35: #{decoder_forward.1} parent=27 // pred_region
          %s332 = sand.u32 %s34, 1
          %s333 = scalar_lea.sflag [#allocation9], %s332
          %s334 = sand.u32 %s91, 1
          %s335 = smul.addr %s334, 8
          %s336 = scalar_lea.vmem [#allocation8], %s335
          %s338 = ssub.s32 128, 128
          %339 = vsyncadd %s333, %s338
          %s340 = smul.addr %s34, 128
          %s341 = scalar_lea.hbm %s3, %s340
          %s343 = sshll.u32 %s336, 4
          %s344 = int_to_ptr.vmem [resolvable:$true] %s343
          %346 = dma.hbm_to_vmem [thread:$0]  %s341, 128, %s344, %s333
        $region36: #{decoder_forward.1} parent=27 // pred_fallthru
          _
        // Predicated region
        $region37: #{decoder_forward.1} parent=27 // pred_check
          %p347 = pneg %p127
        $region38: #{decoder_forward.1} parent=27 // pred_check_branch
          %349 = sbr.rel (%p347) target = $region40
        $region39: #{decoder_forward.1} parent=27 // pred_region
          %s350 = sand.u32 %s34, 1
          %s351 = scalar_lea.sflag [#allocation9], %s350
          %s352 = sand.u32 %s117, 1
          %s353 = smul.addr %s352, 1024
          %s354 = scalar_lea.vmem [#allocation10], %s353
          %s356 = ssub.s32 16384, 16384
          %357 = vsyncadd %s351, %s356
          %s358 = smul.addr %s34, 128
          %s359 = smul.addr %s358, 128
          %s360 = scalar_lea.hbm %s4, %s359
          %s361 = sshll.u32 %s354, 4
          %s362 = int_to_ptr.vmem [resolvable:$true] %s361
          %367 = dma.hbm_to_vmem [thread:$0]  %s360, 16384, %s362, %s351, 512, 512, 32
        $region40: #{decoder_forward.1} parent=27 // pred_fallthru
          _
        // Predicated region
        $region41: #{decoder_forward.1} parent=27 // pred_check
          %p368 = pneg %p153
        $region42: #{decoder_forward.1} parent=27 // pred_check_branch
          %370 = sbr.rel (%p368) target = $region44
        $region43: #{decoder_forward.1} parent=27 // pred_region
          %s371 = sand.u32 %s34, 1
          %s372 = scalar_lea.sflag [#allocation12], %s371
          %s373 = sand.u32 %s143, 1
          %s374 = smul.addr %s373, 4
          %s375 = scalar_lea.vmem [#allocation11], %s374
          %s377 = ssub.s32 64, 64
          %378 = vsyncadd %s372, %s377
          %s379 = smul.addr %s34, 4
          %s380 = smul.addr %s379, 16
          %s381 = scalar_lea.hbm %s5, %s380
          %s383 = sshll.u32 %s375, 4
          %s384 = int_to_ptr.vmem [resolvable:$true] %s383
          %386 = dma.hbm_to_vmem [thread:$0]  %s381, 64, %s384, %s372
        $region44: #{decoder_forward.1} parent=27 // pred_fallthru
          _
      $region28: #{decoder_forward.1} parent=5 // pred_fallthru
        _
      %p387 = scmp.le.s32.totalorder 1, %s34
      %p388 = scmp.lt.s32.totalorder %s34, 3
      %p389 = pnand %p387, %p388
      %p390 = pneg %p389
      // Predicated region
      $region45: #{decoder_forward.1} parent=5 // pred_check
        _
      $region46: #{decoder_forward.1} parent=5 // pred_check_branch
        %392 = sbr.rel (%p389) target = $region48
      $region47: #{decoder_forward.1} parent=5 // pred_region
        %s393 = ssub.s32 %s34, 1
        // Predicated region
        $region49: #{decoder_forward.1} parent=47 // pred_check
          %p394 = pneg %p55
        $region50: #{decoder_forward.1} parent=47 // pred_check_branch
          %396 = sbr.rel (%p394) target = $region52
        $region51: #{decoder_forward.1} parent=47 // pred_region
          %397 = dma.done [#allocation6], 4096
        $region52: #{decoder_forward.1} parent=47 // pred_fallthru
          _
        %s398 = sand.u32 %s39, 1
        %s399 = scalar_lea.sflag [#allocation9], %s398
        %s400 = sand.u32 %s94, 1
        %s401 = smul.addr %s400, 8
        %s402 = scalar_lea.vmem [#allocation8], %s401
        // Predicated region
        $region53: #{decoder_forward.1} parent=47 // pred_check
          %p403 = pneg %p107
        $region54: #{decoder_forward.1} parent=47 // pred_check_branch
          %405 = sbr.rel (%p403) target = $region56
        $region55: #{decoder_forward.1} parent=47 // pred_region
          %406 = dma.done %s399, 128
        $region56: #{decoder_forward.1} parent=47 // pred_fallthru
          _
        %s407 = sand.u32 %s39, 1
        %s408 = scalar_lea.sflag [#allocation9], %s407
        %s409 = sand.u32 %s120, 1
        %s410 = smul.addr %s409, 1024
        %s411 = scalar_lea.vmem [#allocation10], %s410
        // Predicated region
        $region57: #{decoder_forward.1} parent=47 // pred_check
          %p412 = pneg %p133
        $region58: #{decoder_forward.1} parent=47 // pred_check_branch
          %414 = sbr.rel (%p412) target = $region60
        $region59: #{decoder_forward.1} parent=47 // pred_region
          %415 = dma.done %s408, 16384
        $region60: #{decoder_forward.1} parent=47 // pred_fallthru
          _
        %s416 = sand.u32 %s39, 1
        %s417 = scalar_lea.sflag [#allocation12], %s416
        %s418 = sand.u32 %s146, 1
        %s419 = smul.addr %s418, 4
        %s420 = scalar_lea.vmem [#allocation11], %s419
        // Predicated region
        $region61: #{decoder_forward.1} parent=47 // pred_check
          %p421 = pneg %p159
        $region62: #{decoder_forward.1} parent=47 // pred_check_branch
          %423 = sbr.rel (%p421) target = $region64
        $region63: #{decoder_forward.1} parent=47 // pred_region
          %424 = dma.done %s417, 64
        $region64: #{decoder_forward.1} parent=47 // pred_fallthru
          _
        // Predicated region
        $region65: #{decoder_forward.1} parent=47 // pred_check
          %p425 = pneg %p180
        $region66: #{decoder_forward.1} parent=47 // pred_check_branch
          %427 = sbr.rel (%p425) target = $region68
        $region67: #{decoder_forward.1} parent=47 // pred_region
          %428 = dma.done [#allocation12], 4096
        $region68: #{decoder_forward.1} parent=47 // pred_fallthru
          _
        %p429 = pneg %p55
        %p430 = pneg %p52
        %p431 = scmp.lt.s32.totalorder %s39, 1
        %s432 = scalar_select %p431, %s39, 1
        %s433 = smul.addr %s432, 8
        %s434 = scalar_lea.vmem %s2, %s433
        %p435 = pneg %p81
        %p436 = pneg %p78
        %s437 = sand.u32 %s39, 1
        %s438 = scalar_lea.sflag [#allocation9], %s437
        %s439 = sand.u32 %s94, 1
        %s440 = smul.addr %s439, 8
        %s441 = scalar_lea.vmem [#allocation8], %s440
        %p442 = pneg %p107
        %p443 = pneg %p104
        %s444 = sand.u32 %s39, 1
        %s445 = scalar_lea.sflag [#allocation9], %s444
        %s446 = sand.u32 %s120, 1
        %s447 = smul.addr %s446, 1024
        %s448 = scalar_lea.vmem [#allocation10], %s447
        %p449 = pneg %p133
        %p450 = pneg %p130
        %s451 = sand.u32 %s39, 1
        %s452 = scalar_lea.sflag [#allocation12], %s451
        %s453 = sand.u32 %s146, 1
        %s454 = smul.addr %s453, 4
        %s455 = scalar_lea.vmem [#allocation11], %s454
        %p456 = pneg %p159
        %p457 = pneg %p156
        %p458 = pneg %p180
        %p459 = pneg %p177
        %p460 = pneg %p201
        %p461 = pneg %p198
        %p462 = pneg %p222
        %p463 = pneg %p219
        %p464 = pneg %p248
        %p465 = pneg %p245
        %s466 = sand.u32 %s39, 1
        %s467 = scalar_lea.sflag [#allocation16], %s466
        %s468 = sand.u32 %s235, 1
        %s469 = smul.addr %s468, 8
        %s470 = scalar_lea.vmem [#allocation15], %s469
        %p471 = pneg %p274
        %p472 = pneg %p271
        %s473 = sand.u32 %s39, 1
        %s474 = scalar_lea.sflag [#allocation16], %s473
        %s475 = sand.u32 %s261, 1
        %s476 = smul.addr %s475, 8
        %s477 = scalar_lea.vmem [#allocation17], %s476
        %p478 = scmp.lt.s32.totalorder %s39, 1
        %s479 = scalar_select %p478, %s39, 1
        %s480 = smul.addr %s479, 8
        %s481 = scalar_lea.vmem %s2, %s480
        %p482 = scmp.eq.s32.totalorder %s39, 0
        // Predicated region
        $region69: #{decoder_forward.1} parent=47 // pred_check
          %p483 = pneg %p482
        $region70: #{decoder_forward.1} parent=47 // pred_check_branch
          %485 = sbr.rel (%p483) target = $region72
        $region71: #{decoder_forward.1} parent=47 // pred_region
          %s486 = sld [smem:[#allocation4]]
          %s487 = scalar_lea.vmem [#allocation5], %s486
          %v488 = vld [vmem:[%s487] sm:$0x1]
          %489 = vst [vmem:[#allocation2] sm:$0x1] %v488
          %s490 = sld [smem:[#allocation4 + $0x1]]
          %s491 = scalar_lea.vmem [#allocation5], %s490
          %v492 = vld [vmem:[%s491] sm:$0x1]
          %493 = vst [vmem:[#allocation2 + $0x1] sm:$0x1] %v492
          %s494 = sld [smem:[#allocation4 + $0x2]]
          %s495 = scalar_lea.vmem [#allocation5], %s494
          %v496 = vld [vmem:[%s495] sm:$0x1]
          %497 = vst [vmem:[#allocation2 + $0x2] sm:$0x1] %v496
          %s498 = sld [smem:[#allocation4 + $0x3]]
          %s499 = scalar_lea.vmem [#allocation5], %s498
          %v500 = vld [vmem:[%s499] sm:$0x1]
          %501 = vst [vmem:[#allocation2 + $0x3] sm:$0x1] %v500
          %s502 = sld [smem:[#allocation4 + $0x4]]
          %s503 = scalar_lea.vmem [#allocation5], %s502
          %v504 = vld [vmem:[%s503] sm:$0x1]
          %505 = vst [vmem:[#allocation2 + $0x4] sm:$0x1] %v504
          %s506 = sld [smem:[#allocation4 + $0x5]]
          %s507 = scalar_lea.vmem [#allocation5], %s506
          %v508 = vld [vmem:[%s507] sm:$0x1]
          %509 = vst [vmem:[#allocation2 + $0x5] sm:$0x1] %v508
          %s510 = sld [smem:[#allocation4 + $0x6]]
          %s511 = scalar_lea.vmem [#allocation5], %s510
          %v512 = vld [vmem:[%s511] sm:$0x1]
          %513 = vst [vmem:[#allocation2 + $0x6] sm:$0x1] %v512
          %s514 = sld [smem:[#allocation4 + $0x7]]
          %s515 = scalar_lea.vmem [#allocation5], %s514
          %v516 = vld [vmem:[%s515] sm:$0x1]
          %517 = vst [vmem:[#allocation2 + $0x7] sm:$0x1] %v516
        $region72: #{decoder_forward.1} parent=47 // pred_fallthru
          _
        %v518 = vld [vmem:[%s481] sm:$0xff]
        %v519 = vld [vmem:[%s402] sm:$0xff]
        %v520 = vld [vmem:[#allocation2] sm:$0xff]
        %v521 = vld [vmem:[%s411] sm:$0xff]
        %v522 = vld [vmem:[%s411 + $0x8] sm:$0xff]
        %v523 = vld [vmem:[%s411 + $0x10] sm:$0xff]
        %v524 = vld [vmem:[%s411 + $0x18] sm:$0xff]
        %v525 = vld [vmem:[%s411 + $0x20] sm:$0xff]
        %v526 = vld [vmem:[%s411 + $0x28] sm:$0xff]
        %v527 = vld [vmem:[%s411 + $0x30] sm:$0xff]
        %v528 = vld [vmem:[%s411 + $0x38] sm:$0xff]
        %v529 = vld [vmem:[%s411 + $0x40] sm:$0xff]
        %v530 = vld [vmem:[%s411 + $0x48] sm:$0xff]
        %v531 = vld [vmem:[%s411 + $0x50] sm:$0xff]
        %v532 = vld [vmem:[%s411 + $0x58] sm:$0xff]
        %v533 = vld [vmem:[%s411 + $0x60] sm:$0xff]
        %v534 = vld [vmem:[%s411 + $0x68] sm:$0xff]
        %v535 = vld [vmem:[%s411 + $0x70] sm:$0xff]
        %v536 = vld [vmem:[%s411 + $0x78] sm:$0xff]
        %v537 = vld [vmem:[%s411 + $0x80] sm:$0xff]
        %v538 = vld [vmem:[%s411 + $0x88] sm:$0xff]
        %v539 = vld [vmem:[%s411 + $0x90] sm:$0xff]
        %v540 = vld [vmem:[%s411 + $0x98] sm:$0xff]
        %v541 = vld [vmem:[%s411 + $0xa0] sm:$0xff]
        %v542 = vld [vmem:[%s411 + $0xa8] sm:$0xff]
        %v543 = vld [vmem:[%s411 + $0xb0] sm:$0xff]
        %v544 = vld [vmem:[%s411 + $0xb8] sm:$0xff]
        %v545 = vld [vmem:[%s411 + $0xc0] sm:$0xff]
        %v546 = vld [vmem:[%s411 + $0xc8] sm:$0xff]
        %v547 = vld [vmem:[%s411 + $0xd0] sm:$0xff]
        %v548 = vld [vmem:[%s411 + $0xd8] sm:$0xff]
        %v549 = vld [vmem:[%s411 + $0xe0] sm:$0xff]
        %v550 = vld [vmem:[%s411 + $0xe8] sm:$0xff]
        %v551 = vld [vmem:[%s411 + $0xf0] sm:$0xff]
        %v552 = vld [vmem:[%s411 + $0xf8] sm:$0xff]
        %v553 = vld [vmem:[%s411 + $0x100] sm:$0xff]
        %v554 = vld [vmem:[%s411 + $0x108] sm:$0xff]
        %v555 = vld [vmem:[%s411 + $0x110] sm:$0xff]
        %v556 = vld [vmem:[%s411 + $0x118] sm:$0xff]
        %v557 = vld [vmem:[%s411 + $0x120] sm:$0xff]
        %v558 = vld [vmem:[%s411 + $0x128] sm:$0xff]
        %v559 = vld [vmem:[%s411 + $0x130] sm:$0xff]
        %v560 = vld [vmem:[%s411 + $0x138] sm:$0xff]
        %v561 = vld [vmem:[%s411 + $0x140] sm:$0xff]
        %v562 = vld [vmem:[%s411 + $0x148] sm:$0xff]
        %v563 = vld [vmem:[%s411 + $0x150] sm:$0xff]
        %v564 = vld [vmem:[%s411 + $0x158] sm:$0xff]
        %v565 = vld [vmem:[%s411 + $0x160] sm:$0xff]
        %v566 = vld [vmem:[%s411 + $0x168] sm:$0xff]
        %v567 = vld [vmem:[%s411 + $0x170] sm:$0xff]
        %v568 = vld [vmem:[%s411 + $0x178] sm:$0xff]
        %v569 = vld [vmem:[%s411 + $0x180] sm:$0xff]
        %v570 = vld [vmem:[%s411 + $0x188] sm:$0xff]
        %v571 = vld [vmem:[%s411 + $0x190] sm:$0xff]
        %v572 = vld [vmem:[%s411 + $0x198] sm:$0xff]
        %v573 = vld [vmem:[%s411 + $0x1a0] sm:$0xff]
        %v574 = vld [vmem:[%s411 + $0x1a8] sm:$0xff]
        %v575 = vld [vmem:[%s411 + $0x1b0] sm:$0xff]
        %v576 = vld [vmem:[%s411 + $0x1b8] sm:$0xff]
        %v577 = vld [vmem:[%s411 + $0x1c0] sm:$0xff]
        %v578 = vld [vmem:[%s411 + $0x1c8] sm:$0xff]
        %v579 = vld [vmem:[%s411 + $0x1d0] sm:$0xff]
        %v580 = vld [vmem:[%s411 + $0x1d8] sm:$0xff]
        %v581 = vld [vmem:[%s411 + $0x1e0] sm:$0xff]
        %v582 = vld [vmem:[%s411 + $0x1e8] sm:$0xff]
        %v583 = vld [vmem:[%s411 + $0x1f0] sm:$0xff]
        %v584 = vld [vmem:[%s411 + $0x1f8] sm:$0xff]
        %v585 = vld [vmem:[%s411 + $0x200] sm:$0xff]
        %v586 = vld [vmem:[%s411 + $0x208] sm:$0xff]
        %v587 = vld [vmem:[%s411 + $0x210] sm:$0xff]
        %v588 = vld [vmem:[%s411 + $0x218] sm:$0xff]
        %v589 = vld [vmem:[%s411 + $0x220] sm:$0xff]
        %v590 = vld [vmem:[%s411 + $0x228] sm:$0xff]
        %v591 = vld [vmem:[%s411 + $0x230] sm:$0xff]
        %v592 = vld [vmem:[%s411 + $0x238] sm:$0xff]
        %v593 = vld [vmem:[%s411 + $0x240] sm:$0xff]
        %v594 = vld [vmem:[%s411 + $0x248] sm:$0xff]
        %v595 = vld [vmem:[%s411 + $0x250] sm:$0xff]
        %v596 = vld [vmem:[%s411 + $0x258] sm:$0xff]
        %v597 = vld [vmem:[%s411 + $0x260] sm:$0xff]
        %v598 = vld [vmem:[%s411 + $0x268] sm:$0xff]
        %v599 = vld [vmem:[%s411 + $0x270] sm:$0xff]
        %v600 = vld [vmem:[%s411 + $0x278] sm:$0xff]
        %v601 = vld [vmem:[%s411 + $0x280] sm:$0xff]
        %v602 = vld [vmem:[%s411 + $0x288] sm:$0xff]
        %v603 = vld [vmem:[%s411 + $0x290] sm:$0xff]
        %v604 = vld [vmem:[%s411 + $0x298] sm:$0xff]
        %v605 = vld [vmem:[%s411 + $0x2a0] sm:$0xff]
        %v606 = vld [vmem:[%s411 + $0x2a8] sm:$0xff]
        %v607 = vld [vmem:[%s411 + $0x2b0] sm:$0xff]
        %v608 = vld [vmem:[%s411 + $0x2b8] sm:$0xff]
        %v609 = vld [vmem:[%s411 + $0x2c0] sm:$0xff]
        %v610 = vld [vmem:[%s411 + $0x2c8] sm:$0xff]
        %v611 = vld [vmem:[%s411 + $0x2d0] sm:$0xff]
        %v612 = vld [vmem:[%s411 + $0x2d8] sm:$0xff]
        %v613 = vld [vmem:[%s411 + $0x2e0] sm:$0xff]
        %v614 = vld [vmem:[%s411 + $0x2e8] sm:$0xff]
        %v615 = vld [vmem:[%s411 + $0x2f0] sm:$0xff]
        %v616 = vld [vmem:[%s411 + $0x2f8] sm:$0xff]
        %v617 = vld [vmem:[%s411 + $0x300] sm:$0xff]
        %v618 = vld [vmem:[%s411 + $0x308] sm:$0xff]
        %v619 = vld [vmem:[%s411 + $0x310] sm:$0xff]
        %v620 = vld [vmem:[%s411 + $0x318] sm:$0xff]
        %v621 = vld [vmem:[%s411 + $0x320] sm:$0xff]
        %v622 = vld [vmem:[%s411 + $0x328] sm:$0xff]
        %v623 = vld [vmem:[%s411 + $0x330] sm:$0xff]
        %v624 = vld [vmem:[%s411 + $0x338] sm:$0xff]
        %v625 = vld [vmem:[%s411 + $0x340] sm:$0xff]
        %v626 = vld [vmem:[%s411 + $0x348] sm:$0xff]
        %v627 = vld [vmem:[%s411 + $0x350] sm:$0xff]
        %v628 = vld [vmem:[%s411 + $0x358] sm:$0xff]
        %v629 = vld [vmem:[%s411 + $0x360] sm:$0xff]
        %v630 = vld [vmem:[%s411 + $0x368] sm:$0xff]
        %v631 = vld [vmem:[%s411 + $0x370] sm:$0xff]
        %v632 = vld [vmem:[%s411 + $0x378] sm:$0xff]
        %v633 = vld [vmem:[%s411 + $0x380] sm:$0xff]
        %v634 = vld [vmem:[%s411 + $0x388] sm:$0xff]
        %v635 = vld [vmem:[%s411 + $0x390] sm:$0xff]
        %v636 = vld [vmem:[%s411 + $0x398] sm:$0xff]
        %v637 = vld [vmem:[%s411 + $0x3a0] sm:$0xff]
        %v638 = vld [vmem:[%s411 + $0x3a8] sm:$0xff]
        %v639 = vld [vmem:[%s411 + $0x3b0] sm:$0xff]
        %v640 = vld [vmem:[%s411 + $0x3b8] sm:$0xff]
        %v641 = vld [vmem:[%s411 + $0x3c0] sm:$0xff]
        %v642 = vld [vmem:[%s411 + $0x3c8] sm:$0xff]
        %v643 = vld [vmem:[%s411 + $0x3d0] sm:$0xff]
        %v644 = vld [vmem:[%s411 + $0x3d8] sm:$0xff]
        %v645 = vld [vmem:[%s411 + $0x3e0] sm:$0xff]
        %v646 = vld [vmem:[%s411 + $0x3e8] sm:$0xff]
        %v647 = vld [vmem:[%s411 + $0x3f0] sm:$0xff]
        %v648 = vld [vmem:[%s411 + $0x3f8] sm:$0xff]
        %v649 = vld [vmem:[%s420] sm:$0xf]
        %v651 = vlaneseq
        %v652 = vshrl.u32 %v651, 7
        %v653 = vsub.s32 0, %v652
        %v654 = vrot.slane %v649, %v653
        %v655 = vlaneseq
        %v656 = vshrl.u32 %v655, 7
        %v657 = vsub.s32 1, %v656
        %v658 = vrot.slane %v649, %v657
        %v659 = vlaneseq
        %v660 = vshrl.u32 %v659, 7
        %v661 = vsub.s32 2, %v660
        %v662 = vrot.slane %v649, %v661
        %v663 = vlaneseq
        %v664 = vshrl.u32 %v663, 7
        %v665 = vsub.s32 3, %v664
        %v666 = vrot.slane %v649, %v665
        %671 = vmatprep.subr.mxu0 %v522
        %672 = vmatpush1.msra.mxu0 %v521
        %673 = vmatprep.subr.mxu0 %v526
        %674 = vmatpush1.msra.mxu0 %v525
        %675 = vmatprep.subr.mxu0 %v530
        %676 = vmatpush1.msra.mxu0 %v529
        %677 = vmatprep.subr.mxu0 %v534
        %678 = vmatpush1.msra.mxu0 %v533
        %679 = vmatprep.subr.mxu0 %v538
        %680 = vmatpush1.msra.mxu0 %v537
        %681 = vmatprep.subr.mxu0 %v542
        %682 = vmatpush1.msra.mxu0 %v541
        %683 = vmatprep.subr.mxu0 %v546
        %684 = vmatpush1.msra.mxu0 %v545
        %685 = vmatprep.subr.mxu0 %v550
        %686 = vmatpush1.msra.mxu0 %v549
        %687 = vmatprep.subr.mxu0 %v554
        %688 = vmatpush1.msra.mxu0 %v553
        %689 = vmatprep.subr.mxu0 %v558
        %690 = vmatpush1.msra.mxu0 %v557
        %691 = vmatprep.subr.mxu0 %v562
        %692 = vmatpush1.msra.mxu0 %v561
        %693 = vmatprep.subr.mxu0 %v566
        %694 = vmatpush1.msra.mxu0 %v565
        %695 = vmatprep.subr.mxu0 %v570
        %696 = vmatpush1.msra.mxu0 %v569
        %697 = vmatprep.subr.mxu0 %v574
        %698 = vmatpush1.msra.mxu0 %v573
        %699 = vmatprep.subr.mxu0 %v578
        %700 = vmatpush1.msra.mxu0 %v577
        %701 = vmatprep.subr.mxu0 %v582
        %702 = vmatpush1.msra.mxu0 %v581
        %703 = vmatprep.subr.mxu0 %v586
        %704 = vmatpush1.msra.mxu0 %v585
        %705 = vmatprep.subr.mxu0 %v590
        %706 = vmatpush1.msra.mxu0 %v589
        %707 = vmatprep.subr.mxu0 %v594
        %708 = vmatpush1.msra.mxu0 %v593
        %709 = vmatprep.subr.mxu0 %v598
        %710 = vmatpush1.msra.mxu0 %v597
        %711 = vmatprep.subr.mxu0 %v602
        %712 = vmatpush1.msra.mxu0 %v601
        %713 = vmatprep.subr.mxu0 %v606
        %714 = vmatpush1.msra.mxu0 %v605
        %715 = vmatprep.subr.mxu0 %v610
        %716 = vmatpush1.msra.mxu0 %v609
        %717 = vmatprep.subr.mxu0 %v614
        %718 = vmatpush1.msra.mxu0 %v613
        %719 = vmatprep.subr.mxu0 %v618
        %720 = vmatpush1.msra.mxu0 %v617
        %721 = vmatprep.subr.mxu0 %v622
        %722 = vmatpush1.msra.mxu0 %v621
        %723 = vmatprep.subr.mxu0 %v626
        %724 = vmatpush1.msra.mxu0 %v625
        %725 = vmatprep.subr.mxu0 %v630
        %726 = vmatpush1.msra.mxu0 %v629
        %727 = vmatprep.subr.mxu0 %v634
        %728 = vmatpush1.msra.mxu0 %v633
        %729 = vmatprep.subr.mxu0 %v638
        %730 = vmatpush1.msra.mxu0 %v637
        %731 = vmatprep.subr.mxu0 %v642
        %732 = vmatpush1.msra.mxu0 %v641
        %733 = vmatprep.subr.mxu0 %v646
        %734 = vmatpush1.msra.mxu0 %v645
        %735 = vmatprep.mubr.f32.mxu0 %v518
        %736 = vmatmul.mubr.f32.gmra.mrb[0].mxu0 %v520
        %v737 = vpop.f32.mrb[0].mxu0
        %v738 = vadd.f32 %v654, %v737
        %v739 = vpop.f32.mrb[0].mxu0
        %v740 = vadd.f32 %v658, %v739
        %741 = vdwg.mxu0
        %742 = vmatprep.subr.mxu0 %v524
        %743 = vmatpush1.msra.mxu0 %v523
        %744 = vmatprep.subr.mxu0 %v528
        %745 = vmatpush1.msra.mxu0 %v527
        %746 = vmatprep.subr.mxu0 %v532
        %747 = vmatpush1.msra.mxu0 %v531
        %748 = vmatprep.subr.mxu0 %v536
        %749 = vmatpush1.msra.mxu0 %v535
        %750 = vmatprep.subr.mxu0 %v540
        %751 = vmatpush1.msra.mxu0 %v539
        %752 = vmatprep.subr.mxu0 %v544
        %753 = vmatpush1.msra.mxu0 %v543
        %754 = vmatprep.subr.mxu0 %v548
        %755 = vmatpush1.msra.mxu0 %v547
        %756 = vmatprep.subr.mxu0 %v552
        %757 = vmatpush1.msra.mxu0 %v551
        %758 = vmatprep.subr.mxu0 %v556
        %759 = vmatpush1.msra.mxu0 %v555
        %760 = vmatprep.subr.mxu0 %v560
        %761 = vmatpush1.msra.mxu0 %v559
        %762 = vmatprep.subr.mxu0 %v564
        %763 = vmatpush1.msra.mxu0 %v563
        %764 = vmatprep.subr.mxu0 %v568
        %765 = vmatpush1.msra.mxu0 %v567
        %766 = vmatprep.subr.mxu0 %v572
        %767 = vmatpush1.msra.mxu0 %v571
        %768 = vmatprep.subr.mxu0 %v576
        %769 = vmatpush1.msra.mxu0 %v575
        %770 = vmatprep.subr.mxu0 %v580
        %771 = vmatpush1.msra.mxu0 %v579
        %772 = vmatprep.subr.mxu0 %v584
        %773 = vmatpush1.msra.mxu0 %v583
        %774 = vmatprep.subr.mxu0 %v588
        %775 = vmatpush1.msra.mxu0 %v587
        %776 = vmatprep.subr.mxu0 %v592
        %777 = vmatpush1.msra.mxu0 %v591
        %778 = vmatprep.subr.mxu0 %v596
        %779 = vmatpush1.msra.mxu0 %v595
        %780 = vmatprep.subr.mxu0 %v600
        %781 = vmatpush1.msra.mxu0 %v599
        %782 = vmatprep.subr.mxu0 %v604
        %783 = vmatpush1.msra.mxu0 %v603
        %784 = vmatprep.subr.mxu0 %v608
        %785 = vmatpush1.msra.mxu0 %v607
        %786 = vmatprep.subr.mxu0 %v612
        %787 = vmatpush1.msra.mxu0 %v611
        %788 = vmatprep.subr.mxu0 %v616
        %789 = vmatpush1.msra.mxu0 %v615
        %790 = vmatprep.subr.mxu0 %v620
        %791 = vmatpush1.msra.mxu0 %v619
        %792 = vmatprep.subr.mxu0 %v624
        %793 = vmatpush1.msra.mxu0 %v623
        %794 = vmatprep.subr.mxu0 %v628
        %795 = vmatpush1.msra.mxu0 %v627
        %796 = vmatprep.subr.mxu0 %v632
        %797 = vmatpush1.msra.mxu0 %v631
        %798 = vmatprep.subr.mxu0 %v636
        %799 = vmatpush1.msra.mxu0 %v635
        %800 = vmatprep.subr.mxu0 %v640
        %801 = vmatpush1.msra.mxu0 %v639
        %802 = vmatprep.subr.mxu0 %v644
        %803 = vmatpush1.msra.mxu0 %v643
        %804 = vmatprep.subr.mxu0 %v648
        %805 = vmatpush1.msra.mxu0 %v647
        %806 = vmatprep.mubr.f32.mxu0 %v518
        %807 = vmatmul.mubr.f32.gmra.mrb[0].mxu0 %v520
        %v808 = vpop.f32.mrb[0].mxu0
        %v809 = vadd.f32 %v662, %v808
        %v810 = vpop.f32.mrb[0].mxu0
        %v811 = vadd.f32 %v666, %v810
        %812 = vdwg.mxu0
        %v813 = vxor.u32 %v738, 2147483648
        %v814 = vxor.u32 %v740, 2147483648
        %v815 = vxor.u32 %v809, 2147483648
        %v816 = vmul.f32 %v813, 1.442695
        %v817 = vpow.pop %v816
        %v818 = vmul.f32 %v814, 1.442695
        %v819 = vpow.pop %v818
        %v820 = vmul.f32 %v815, 1.442695
        %v821 = vpow.pop %v820
        %v822 = vadd.f32 %v817, 1.0
        %v823 = vadd.f32 %v819, 1.0
        %v824 = vadd.f32 %v821, 1.0
        %v825 = vrcp.pop %v822
        %v826 = vmul.f32 1.0, %v825
        %v827 = vrcp.pop %v823
        %v828 = vmul.f32 1.0, %v827
        %v829 = vrcp.pop %v824
        %v830 = vmul.f32 1.0, %v829
        %v831 = vtanh.pop %v811
        %v832 = vmul.f32 %v828, %v519
        %v833 = vmul.f32 %v826, %v831
        %v834 = vadd.f32 %v832, %v833
        %v835 = vtanh.pop %v834
        %v836 = vmul.f32 %v830, %v835
        %837 = vst [vmem:[%s470] sm:$0xff] %v836
        %838 = vst [vmem:[%s477] sm:$0xff] %v834
        %839 = vst [vmem:[#allocation2] sm:$0xff] %v836
        %p840 = scmp.eq.s32.totalorder %s39, 1
        // Predicated region
        $region73: #{decoder_forward.1} parent=47 // pred_check
          %p841 = pneg %p840
        $region74: #{decoder_forward.1} parent=47 // pred_check_branch
          %843 = sbr.rel (%p841) target = $region76
        $region75: #{decoder_forward.1} parent=47 // pred_region
          %v844 = vld [vmem:[#allocation13] sm:$0xff]
          %v845 = vld [vmem:[#allocation13 + $0x8] sm:$0xff]
          %v846 = vld [vmem:[#allocation13 + $0x10] sm:$0xff]
          %v847 = vld [vmem:[#allocation13 + $0x18] sm:$0xff]
          %v848 = vld [vmem:[#allocation13 + $0x20] sm:$0xff]
          %v849 = vld [vmem:[#allocation13 + $0x28] sm:$0xff]
          %v850 = vld [vmem:[#allocation13 + $0x30] sm:$0xff]
          %v851 = vld [vmem:[#allocation13 + $0x38] sm:$0xff]
          %v852 = vld [vmem:[#allocation13 + $0x40] sm:$0xff]
          %v853 = vld [vmem:[#allocation13 + $0x48] sm:$0xff]
          %v854 = vld [vmem:[#allocation13 + $0x50] sm:$0xff]
          %v855 = vld [vmem:[#allocation13 + $0x58] sm:$0xff]
          %v856 = vld [vmem:[#allocation13 + $0x60] sm:$0xff]
          %v857 = vld [vmem:[#allocation13 + $0x68] sm:$0xff]
          %v858 = vld [vmem:[#allocation13 + $0x70] sm:$0xff]
          %v859 = vld [vmem:[#allocation13 + $0x78] sm:$0xff]
          %v860 = vld [vmem:[#allocation13 + $0x80] sm:$0xff]
          %v861 = vld [vmem:[#allocation13 + $0x88] sm:$0xff]
          %v862 = vld [vmem:[#allocation13 + $0x90] sm:$0xff]
          %v863 = vld [vmem:[#allocation13 + $0x98] sm:$0xff]
          %v864 = vld [vmem:[#allocation13 + $0xa0] sm:$0xff]
          %v865 = vld [vmem:[#allocation13 + $0xa8] sm:$0xff]
          %v866 = vld [vmem:[#allocation13 + $0xb0] sm:$0xff]
          %v867 = vld [vmem:[#allocation13 + $0xb8] sm:$0xff]
          %v868 = vld [vmem:[#allocation13 + $0xc0] sm:$0xff]
          %v869 = vld [vmem:[#allocation13 + $0xc8] sm:$0xff]
          %v870 = vld [vmem:[#allocation13 + $0xd0] sm:$0xff]
          %v871 = vld [vmem:[#allocation13 + $0xd8] sm:$0xff]
          %v872 = vld [vmem:[#allocation13 + $0xe0] sm:$0xff]
          %v873 = vld [vmem:[#allocation13 + $0xe8] sm:$0xff]
          %v874 = vld [vmem:[#allocation13 + $0xf0] sm:$0xff]
          %v875 = vld [vmem:[#allocation13 + $0xf8] sm:$0xff]
          %v876 = vld [vmem:[%s7] sm:$0x3]
          %v878 = vlaneseq
          %v879 = vshrl.u32 %v878, 7
          %v880 = vsub.s32 0, %v879
          %v881 = vrot.slane %v876, %v880
          %v882 = vlaneseq
          %v883 = vshrl.u32 %v882, 7
          %v884 = vsub.s32 1, %v883
          %v885 = vrot.slane %v876, %v884
          %888 = vmatprep.subr.mxu0 %v845
          %889 = vmatpush1.msra.mxu0 %v844
          %890 = vmatprep.subr.mxu0 %v847
          %891 = vmatpush1.msra.mxu0 %v846
          %892 = vmatprep.subr.mxu0 %v849
          %893 = vmatpush1.msra.mxu0 %v848
          %894 = vmatprep.subr.mxu0 %v851
          %895 = vmatpush1.msra.mxu0 %v850
          %896 = vmatprep.subr.mxu0 %v853
          %897 = vmatpush1.msra.mxu0 %v852
          %898 = vmatprep.subr.mxu0 %v855
          %899 = vmatpush1.msra.mxu0 %v854
          %900 = vmatprep.subr.mxu0 %v857
          %901 = vmatpush1.msra.mxu0 %v856
          %902 = vmatprep.subr.mxu0 %v859
          %903 = vmatpush1.msra.mxu0 %v858
          %904 = vmatprep.subr.mxu0 %v861
          %905 = vmatpush1.msra.mxu0 %v860
          %906 = vmatprep.subr.mxu0 %v863
          %907 = vmatpush1.msra.mxu0 %v862
          %908 = vmatprep.subr.mxu0 %v865
          %909 = vmatpush1.msra.mxu0 %v864
          %910 = vmatprep.subr.mxu0 %v867
          %911 = vmatpush1.msra.mxu0 %v866
          %912 = vmatprep.subr.mxu0 %v869
          %913 = vmatpush1.msra.mxu0 %v868
          %914 = vmatprep.subr.mxu0 %v871
          %915 = vmatpush1.msra.mxu0 %v870
          %916 = vmatprep.subr.mxu0 %v873
          %917 = vmatpush1.msra.mxu0 %v872
          %918 = vmatprep.subr.mxu0 %v875
          %919 = vmatpush1.msra.mxu0 %v874
          %920 = vmatprep.subr.mxu0 0.0
          %921 = vmatpush1.msra.mxu0 0.0
          %922 = vmatprep.subr.mxu0 0.0
          %923 = vmatpush1.msra.mxu0 0.0
          %924 = vmatprep.subr.mxu0 0.0
          %925 = vmatpush1.msra.mxu0 0.0
          %926 = vmatprep.subr.mxu0 0.0
          %927 = vmatpush1.msra.mxu0 0.0
          %928 = vmatprep.subr.mxu0 0.0
          %929 = vmatpush1.msra.mxu0 0.0
          %930 = vmatprep.subr.mxu0 0.0
          %931 = vmatpush1.msra.mxu0 0.0
          %932 = vmatprep.subr.mxu0 0.0
          %933 = vmatpush1.msra.mxu0 0.0
          %934 = vmatprep.subr.mxu0 0.0
          %935 = vmatpush1.msra.mxu0 0.0
          %936 = vmatprep.subr.mxu0 0.0
          %937 = vmatpush1.msra.mxu0 0.0
          %938 = vmatprep.subr.mxu0 0.0
          %939 = vmatpush1.msra.mxu0 0.0
          %940 = vmatprep.subr.mxu0 0.0
          %941 = vmatpush1.msra.mxu0 0.0
          %942 = vmatprep.subr.mxu0 0.0
          %943 = vmatpush1.msra.mxu0 0.0
          %944 = vmatprep.subr.mxu0 0.0
          %945 = vmatpush1.msra.mxu0 0.0
          %946 = vmatprep.subr.mxu0 0.0
          %947 = vmatpush1.msra.mxu0 0.0
          %948 = vmatprep.subr.mxu0 0.0
          %949 = vmatpush1.msra.mxu0 0.0
          %950 = vmatprep.subr.mxu0 0.0
          %951 = vmatpush1.msra.mxu0 0.0
          %952 = vmatprep.mubr.f32.mxu0 0.0
          %953 = vmatmul.mubr.f32.gmra.mrb[0].mxu0 %v836
          %v954 = vpop.f32.mrb[0].mxu0
          %v955 = vadd.f32 %v881, %v954
          %v956 = vpop.f32.mrb[0].mxu0
          %v957 = vadd.f32 %v885, %v956
          %958 = vdwg.mxu0
          %959 = vst [vmem:[#allocation14] sm:$0xff] %v955
          %960 = vst [vmem:[#allocation14 + $0x8] sm:$0xff] %v957
        $region76: #{decoder_forward.1} parent=47 // pred_fallthru
          _
        %s961 = sand.u32 %s39, 1
        %s962 = scalar_lea.sflag [#allocation16], %s961
        %s963 = sand.u32 %s235, 1
        %s964 = smul.addr %s963, 8
        %s965 = scalar_lea.vmem [#allocation15], %s964
        %s966 = sand.u32 %s39, 1
        %s967 = scalar_lea.sflag [#allocation16], %s966
        %s968 = sand.u32 %s261, 1
        %s969 = smul.addr %s968, 8
        %s970 = scalar_lea.vmem [#allocation17], %s969
        // Predicated region
        $region77: #{decoder_forward.1} parent=47 // pred_check
          %p971 = pneg %p219
        $region78: #{decoder_forward.1} parent=47 // pred_check_branch
          %973 = sbr.rel (%p971) target = $region80
        $region79: #{decoder_forward.1} parent=47 // pred_region
          %s975 = ssub.s32 256, 256
          %976 = vsyncadd [#allocation7], %s975
          %s978 = sshll.u32 [#allocation14], 4
          %s979 = int_to_ptr.vmem [resolvable:$true] %s978
          %981 = dma.vmem_to_hbm [thread:$0]  %s979, 256, %s8, [#allocation7]
        $region80: #{decoder_forward.1} parent=47 // pred_fallthru
          _
        // Predicated region
        $region81: #{decoder_forward.1} parent=47 // pred_check
          %p982 = pneg %p245
        $region82: #{decoder_forward.1} parent=47 // pred_check_branch
          %984 = sbr.rel (%p982) target = $region84
        $region83: #{decoder_forward.1} parent=47 // pred_region
          %s986 = ssub.s32 128, 128
          %987 = vsyncadd %s962, %s986
          %s988 = smul.addr %s39, 128
          %s989 = scalar_lea.hbm %s9, %s988
          %s991 = sshll.u32 %s965, 4
          %s992 = int_to_ptr.vmem [resolvable:$true] %s991
          %994 = dma.vmem_to_hbm [thread:$0]  %s992, 128, %s989, %s962
        $region84: #{decoder_forward.1} parent=47 // pred_fallthru
          _
        // Predicated region
        $region85: #{decoder_forward.1} parent=47 // pred_check
          %p995 = pneg %p271
        $region86: #{decoder_forward.1} parent=47 // pred_check_branch
          %997 = sbr.rel (%p995) target = $region88
        $region87: #{decoder_forward.1} parent=47 // pred_region
          %s999 = ssub.s32 128, 128
          %1000 = vsyncadd %s967, %s999
          %s1001 = smul.addr %s39, 128
          %s1002 = scalar_lea.hbm %s10, %s1001
          %s1004 = sshll.u32 %s970, 4
          %s1005 = int_to_ptr.vmem [resolvable:$true] %s1004
          %1007 = dma.vmem_to_hbm [thread:$0]  %s1005, 128, %s1002, %s967
        $region88: #{decoder_forward.1} parent=47 // pred_fallthru
          _
        // Predicated region
        $region89: #{decoder_forward.1} parent=47 // pred_check
          %p1008 = pneg %p219
        $region90: #{decoder_forward.1} parent=47 // pred_check_branch
          %1010 = sbr.rel (%p1008) target = $region92
        $region91: #{decoder_forward.1} parent=47 // pred_region
          %1011 = dma.done [#allocation7], 256
        $region92: #{decoder_forward.1} parent=47 // pred_fallthru
          _
      $region48: #{decoder_forward.1} parent=5 // pred_fallthru
        _
      %p1012 = scmp.le.s32.totalorder 2, %s34
      // Predicated region
      $region93: #{decoder_forward.1} parent=5 // pred_check
        %p1013 = pneg %p1012
      $region94: #{decoder_forward.1} parent=5 // pred_check_branch
        %1015 = sbr.rel (%p1013) target = $region96
      $region95: #{decoder_forward.1} parent=5 // pred_region
        %s1016 = ssub.s32 %s34, 2
        // Predicated region
        $region97: #{decoder_forward.1} parent=95 // pred_check
          %p1017 = pneg %p251
        $region98: #{decoder_forward.1} parent=95 // pred_check_branch
          %1019 = sbr.rel (%p1017) target = $region100
        $region99: #{decoder_forward.1} parent=95 // pred_region
          %s1020 = sand.u32 %s40, 1
          %s1021 = scalar_lea.sflag [#allocation16], %s1020
          %s1022 = sand.u32 %s236, 1
          %s1023 = smul.addr %s1022, 8
          %s1024 = scalar_lea.vmem [#allocation15], %s1023
          %1025 = dma.done %s1021, 128
        $region100: #{decoder_forward.1} parent=95 // pred_fallthru
          _
        // Predicated region
        $region101: #{decoder_forward.1} parent=95 // pred_check
          %p1026 = pneg %p277
        $region102: #{decoder_forward.1} parent=95 // pred_check_branch
          %1028 = sbr.rel (%p1026) target = $region104
        $region103: #{decoder_forward.1} parent=95 // pred_region
          %s1029 = sand.u32 %s40, 1
          %s1030 = scalar_lea.sflag [#allocation16], %s1029
          %s1031 = sand.u32 %s262, 1
          %s1032 = smul.addr %s1031, 8
          %s1033 = scalar_lea.vmem [#allocation17], %s1032
          %1034 = dma.done %s1030, 128
        $region104: #{decoder_forward.1} parent=95 // pred_fallthru
          _
      $region96: #{decoder_forward.1} parent=5 // pred_fallthru
        _
    $region6: #{decoder_forward.1} parent=1 // loop_footer
      %s38 = sadd.s32 1, %s34
    $region7: #{decoder_forward.1} parent=1 // loop_footer_branch
      %33 = sbr.rel target = $region3
    $region8: #{decoder_forward.1} parent=1 // loop_exit
      _
    %1035 = vsyncpa [#allocation6], 1
    %s1036 = scalar_lea.sflag [#allocation6], 1
    %1037 = vsyncpa %s1036, 1
    %1038 = vsyncpa [#allocation9], 1
    %s1039 = scalar_lea.sflag [#allocation9], 1
    %1040 = vsyncpa %s1039, 1
    %1041 = vsyncpa [#allocation12], 1
    %s1042 = scalar_lea.sflag [#allocation12], 1
    %1043 = vsyncpa %s1042, 1
    %1044 = vsyncpa [#allocation7], 1
    %s1045 = scalar_lea.sflag [#allocation7], 1
    %1046 = vsyncpa %s1045, 1
    %1047 = vsyncpa [#allocation16], 1
    %s1048 = scalar_lea.sflag [#allocation16], 1
    %1049 = vsyncpa %s1048, 1

</llo_original>
